<compile_context>
chip_gen: v7x
topology: tpu7x:2x2x1
jax: 0.10.0
libtpu: 0.0.40
codegen_flags: <defaults>
</compile_context>

<pallas_src>
import functools

import jax
import jax.numpy as jnp
import numpy as np
from jax.experimental import pallas as pl
from jax.experimental.pallas import tpu as pltpu


def _round_up(v, m):
    return -(-v // m) * m


# ----------------------------------------------------------------------------
# Kernel 1: ranking scores = h @ W  (VPU multiply + XLU lane reduction).
# GUARD: sigmoid AND bias are dropped only because the scores are consumed
# exclusively by top_k (strictly monotone transform / constant shift do not
# change the selected indices) and are never returned.  If scores are ever
# exposed to the caller, re-apply jax.nn.sigmoid(scores + b).
# ----------------------------------------------------------------------------
def _score_kernel(h_ref, w_ref, out_ref):
    x = h_ref[...].astype(jnp.float32)          # per-tile cast (free VPU filler)
    out_ref[...] = jnp.sum(x * w_ref[...], axis=-1, keepdims=True)  # XLU reduce


def _pick_row_tile(n, max_tile=1024):
    """Largest row tile <= max_tile keeping (8,128)-legal blocks."""
    if n <= max_tile:
        return n                        # full extent is always legal
    for t in range(max_tile, 7, -8):    # multiples of 8
        if n % t == 0:
            return t
    return max_tile                     # ragged tail handled by Pallas masking


def compute_scores(h, w):
    """Ranking scores (pre-sigmoid, pre-bias logits), shape (N,) float32."""
    n, d = h.shape
    tn = _pick_row_tile(n)
    w_row = w.reshape(1, d).astype(jnp.float32)
    scores = pl.pallas_call(
        _score_kernel,
        out_shape=jax.ShapeDtypeStruct((n, 1), jnp.float32),
        grid_spec=pltpu.PrefetchScalarGridSpec(
            num_scalar_prefetch=0,
            grid=(pl.cdiv(n, tn),),
            in_specs=[
                pl.BlockSpec((tn, d), lambda i: (i, 0)),   # pipelined h tiles (native dtype)
                pl.BlockSpec((1, d), lambda i: (0, 0)),    # resident weight row
            ],
            out_specs=pl.BlockSpec((tn, 1), lambda i: (i, 0)),
        ),
        compiler_params=pltpu.CompilerParams(
            dimension_semantics=("parallel",),
        ),
    )(h, w_row)
    return scores[:, 0]  # (N,)


# ----------------------------------------------------------------------------
# Kernel 2: fused row gather + column selection for new_g.
# Per grid step: gather `block_rows` rows of g with manual HBM->VMEM DMAs
# (row indices scalar-prefetched into SMEM), build the one-hot column selector
# from an iota/compare while the DMAs are in flight, then emit the
# (block_rows, nk_pad) output block with a single MXU matmul.
# ----------------------------------------------------------------------------
_NUM_DMA_SEMS = 8  # shared round-robin semaphores; all copies are awaited
                   # before any gathered data is read, so sharing is safe.


def _gather_select_kernel(idx_ref, col_idx_ref, g_hbm, new_g_ref, g_buf, sems,
                          *, block_rows):
    i = pl.program_id(0)
    base = i * block_rows

    # Issue all row DMAs up front so they overlap each other and the one-hot
    # construction below (pure DMA into scratch; no staging copies).
    copies = []
    for b in range(block_rows):
        r = idx_ref[base + b]
        c = pltpu.make_async_copy(g_hbm.at[r], g_buf.at[b],
                                  sems.at[b % _NUM_DMA_SEMS])
        c.start()
        copies.append(c)

    # One-hot column selector built while the DMAs are in flight.
    n = g_buf.shape[1]
    nk_pad = col_idx_ref.shape[1]
    iota = jax.lax.broadcasted_iota(jnp.int32, (n, nk_pad), 0)
    onehot = (iota == col_idx_ref[...]).astype(jnp.float32)

    for c in copies:
        c.wait()

    # Fused column gather: new_g block = g[idx_rows, :] @ onehot(idx_cols).
    # HIGHEST precision keeps the one-hot selection exact for arbitrary f32 g.
    rows = g_buf[...].astype(jnp.float32)
    new_g_ref[...] = jnp.dot(
        rows, onehot, preferred_element_type=jnp.float32,
        precision=jax.lax.Precision.HIGHEST,
    ).astype(new_g_ref.dtype)


def _pick_block_rows(n_cols, nk, max_rows=256, budget_bytes=4 << 20):
    """Rows of g gathered per grid step (multiple of 8, VMEM-budgeted)."""
    rows = int(min(max_rows, max(8, budget_bytes // max(4 * n_cols, 1))))
    rows = max(8, (rows // 8) * 8)
    # Keep the grid at >= ~4 steps when possible so both v7x TensorCores get work.
    rows = min(rows, max(64, _round_up(-(-nk // 4), 8)))
    # Never exceed the (8-padded) number of kept rows.
    rows = min(rows, _round_up(nk, 8))
    return rows


def gather_select_g(g, idx_pad, block_rows):
    """new_g_pad[i, j] = g[idx_pad[i], idx_pad[j]] in one streaming pass over
    the selected rows of g; columns selected in-VMEM via a one-hot MXU matmul."""
    nk_pad = idx_pad.shape[0]
    n = g.shape[1]
    assert nk_pad % block_rows == 0
    col_idx = idx_pad.reshape(1, nk_pad).astype(jnp.int32)

    # TODO(synk): for very large graphs (N * nk_pad * 4 approaching the VMEM
    # budget, esp. v7x's 64 MiB) the one-hot / output should be tiled over a
    # second column-grid axis; not needed at the shapes exercised here.
    vmem_est = (
        2 * block_rows * n * 4          # g_buf scratch + f32 copy for the matmul
        + 3 * n * nk_pad * 4            # iota / mask / one-hot temporaries
        + 2 * block_rows * nk_pad * 4   # double-buffered output block
        + 2 * nk_pad * 4                # resident column-index row
    )
    vmem_limit = int(min(max(vmem_est + (8 << 20), 32 << 20), 48 << 20))

    kernel = functools.partial(_gather_select_kernel, block_rows=block_rows)
    new_g_pad = pl.pallas_call(
        kernel,
        out_shape=jax.ShapeDtypeStruct((nk_pad, nk_pad), g.dtype),
        grid_spec=pltpu.PrefetchScalarGridSpec(
            num_scalar_prefetch=1,                             # row idx -> SMEM
            grid=(nk_pad // block_rows,),
            in_specs=[
                pl.BlockSpec((1, nk_pad), lambda i, idx: (0, 0)),  # resident col idx
                pl.BlockSpec(memory_space=pl.ANY),                 # g stays in HBM
            ],
            out_specs=pl.BlockSpec((block_rows, nk_pad), lambda i, idx: (i, 0)),
            scratch_shapes=[
                pltpu.VMEM((block_rows, n), g.dtype),
                pltpu.SemaphoreType.DMA((_NUM_DMA_SEMS,)),
            ],
        ),
        compiler_params=pltpu.CompilerParams(
            dimension_semantics=("parallel",),   # self-contained row blocks (v7x)
            vmem_limit_bytes=vmem_limit,
        ),
    )(idx_pad, col_idx, g)
    return new_g_pad


# ----------------------------------------------------------------------------
# Pool forward
# ----------------------------------------------------------------------------
def pool_forward(g, h, proj_w, proj_b, k):
    """g: [N, N], h: [N, D], proj_w: [D, 1], proj_b: [1, 1], k: float."""
    del proj_b  # constant shift; does not change the top-k ranking (see guard above)
    num_nodes = g.shape[0]
    nk = max(2, int(k * num_nodes))

    scores = compute_scores(h, proj_w)

    # TODO(synk): top_k / sort are data-dependent selection ops with no clean
    # Pallas TPU equivalent; kept as XLA ops.
    _, idx = jax.lax.top_k(scores, nk)
    sorted_idx = jnp.sort(idx).astype(jnp.int32)

    # h row gather moves only nk*D*4 bytes (<1% of the g traffic): plain XLA
    # take per the perf review (halves the DMA descriptor count in the kernel).
    new_h = jnp.take(h, sorted_idx, axis=0)

    # Pad the kept-row index list to a multiple of the per-step row batch
    # (duplicated tail rows / columns are sliced away afterwards).
    block_rows = _pick_block_rows(num_nodes, nk)
    nk_pad = _round_up(nk, block_rows)
    if nk_pad != nk:
        idx_pad = jnp.pad(sorted_idx, (0, nk_pad - nk), mode="edge")
    else:
        idx_pad = sorted_idx

    # Fused Pallas kernel: row gather + in-VMEM column selection in one pass.
    new_g = gather_select_g(g, idx_pad, block_rows)[:nk, :nk]

    return new_g, new_h, sorted_idx


# ----------------------------------------------------------------------------
# Parameter init (mimics nn.Linear(in_dim, 1) default init)
# ----------------------------------------------------------------------------
def init_pool_params(key, in_dim):
    kw, kb = jax.random.split(key)
    bound = 1.0 / np.sqrt(in_dim)
    w = jax.random.uniform(kw, (in_dim, 1), jnp.float32, -bound, bound)
    b = jax.random.uniform(kb, (1, 1), jnp.float32, -bound, bound)
    return w, b


# ----------------------------------------------------------------------------
# Pure-JAX reference (faithful to the torch module) for correctness check
# ----------------------------------------------------------------------------
def pool_forward_ref(g, h, proj_w, proj_b, k):
    num_nodes = g.shape[0]
    nk = max(2, int(k * num_nodes))
    scores = jax.nn.sigmoid((h @ proj_w + proj_b)[:, 0])
    _, idx = jax.lax.top_k(scores, nk)
    sorted_idx = jnp.sort(idx).astype(jnp.int32)
    new_h = h[sorted_idx]
    new_g = g[sorted_idx][:, sorted_idx]
    return new_g, new_h, sorted_idx


if __name__ == "__main__":
    key = jax.random.PRNGKey(0)

    # (N nodes, D features, pool keep fraction). Second config exercises the
    # multi-step gather grid, the padded tail and the fused column selection.
    configs = [(16, 32, 0.5), (1024, 64, 0.6)]

    for (N, D, k_frac) in configs:
        k_h, k_g, k_p, key = jax.random.split(key, 4)
        h = jax.random.normal(k_h, (N, D), dtype=jnp.float32)
        g = (jax.random.uniform(k_g, (N, N), dtype=jnp.float32) > 0.5).astype(jnp.float32)
        g = jnp.maximum(g, g.T)  # symmetric adjacency-like matrix
        proj_w, proj_b = init_pool_params(k_p, D)

        new_g, new_h, sorted_idx = pool_forward(g, h, proj_w, proj_b, k_frac)
        jax.block_until_ready((new_g, new_h, sorted_idx))

        ref_g, ref_h, ref_idx = pool_forward_ref(g, h, proj_w, proj_b, k_frac)
        assert new_g.shape == ref_g.shape and new_h.shape == ref_h.shape
        np.testing.assert_array_equal(np.asarray(sorted_idx), np.asarray(ref_idx))
        np.testing.assert_allclose(np.asarray(new_h), np.asarray(ref_h),
                                   rtol=1e-6, atol=1e-6)
        np.testing.assert_allclose(np.asarray(new_g), np.asarray(ref_g),
                                   rtol=1e-6, atol=1e-6)

    print("KERNEL_OK")
</pallas_src>

<mosaic_0001>
module attributes {stable_mosaic.version = 11 : i64} {
  func.func @_score_kernel(%arg0: i32, %arg1: memref<16x32xf32, #tpu.memory_space<vmem>>, %arg2: memref<1x32xf32, #tpu.memory_space<vmem>>, %arg3: memref<16x1xf32, #tpu.memory_space<vmem>>) attributes {dimension_semantics = [#tpu.dimension_semantics<parallel>], iteration_bounds = array<i64: 1>, scalar_prefetch = 0 : i64, scratch_operands = 0 : i64, tpu.core_type = #tpu.core_type<tc>, window_params = [{transform_indices = @transform_0, window_bounds = array<i64: 16, 32>}, {pipeline_mode = #tpu.pipeline_mode<synchronous>, transform_indices = @transform_1, window_bounds = array<i64: 1, 32>}, {transform_indices = @transform_2, window_bounds = array<i64: 16, 1>}]} {
    %c0 = arith.constant 0 : index
    %c0_0 = arith.constant 0 : index
    %0 = vector.load %arg1[%c0, %c0_0] : memref<16x32xf32, #tpu.memory_space<vmem>>, vector<16x32xf32>
    %c0_1 = arith.constant 0 : index
    %c0_2 = arith.constant 0 : index
    %1 = vector.load %arg2[%c0_1, %c0_2] : memref<1x32xf32, #tpu.memory_space<vmem>>, vector<1x32xf32>
    %2 = vector.broadcast %1 : vector<1x32xf32> to vector<16x32xf32>
    %3 = arith.mulf %0, %2 : vector<16x32xf32>
    %cst = arith.constant dense<0.000000e+00> : vector<16xf32>
    %4 = vector.multi_reduction <add>, %3, %cst [1] : vector<16x32xf32> to vector<16xf32>
    %5 = vector.shape_cast %4 : vector<16xf32> to vector<16x1xf32>
    %c0_3 = arith.constant 0 : index
    %c0_4 = arith.constant 0 : index
    %6 = vector.load %arg3[%c0_3, %c0_4] : memref<16x1xf32, #tpu.memory_space<vmem>>, vector<16x1xf32>
    tpu.vector_store %arg3[%c0_3, %c0_4], %5 {strides = array<i32>} : memref<16x1xf32, #tpu.memory_space<vmem>>, vector<16x1xf32>,
    return
  }
  func.func @transform_0(%arg0: i32) -> (i32, i32) {
    %c0_i32 = arith.constant 0 : i32
    %c0_i32_0 = arith.constant 0 : i32
    return %arg0, %c0_i32 : i32, i32
  }
  func.func @transform_1(%arg0: i32) -> (i32, i32) {
    %c0_i32 = arith.constant 0 : i32
    %c0_i32_0 = arith.constant 0 : i32
    %c0_i32_1 = arith.constant 0 : i32
    return %c0_i32, %c0_i32_0 : i32, i32
  }
  func.func @transform_2(%arg0: i32) -> (i32, i32) {
    %c0_i32 = arith.constant 0 : i32
    %c0_i32_0 = arith.constant 0 : i32
    return %arg0, %c0_i32 : i32, i32
  }
}

</mosaic_0001>

<llo_original>
// kernel: tpu_custom_call.1
$region0: #{tpu_custom_call.1}
  #allocation0 [shape = 'u32[]', space=smem, size = 0x4, offset = 0x4, fixed_abs, tag = 'smem constant byte address 0x4 - core index']
  #allocation1 [shape = 'u32[144,128]{1,0:T(1,128)}', space=vmem, size = 0x12000, scoped, tag = 'internal scratch']
  %s0 = inlined_call_operand.hbm [shape: f32[16,32], index: 0, kind: input, shape index: {}]
  %s1 = inlined_call_operand.vmem [shape: f32[1,32], index: 1, kind: input, shape index: {}]
  %s2 = inlined_call_operand.vmem [shape: f32[16,1], index: 2, kind: output, shape index: {}]
  %s3 = sld [smem:[#allocation0]]
  $region22: #{tpu_custom_call.1} parent=0
    _
  %s5 = ssub.s32 1, %s3
  %s6 = scalar_select 0, %s5, %s3
  $region1: #{tpu_custom_call.1} parent=0
    #allocation2 [shape = 'u8[8192]{0}', space=vmem, size = 0x2000, scoped, tag = 'input window, operand 0, single buffered']
    #allocation3 [shape = 's32[1]{0}', space=sflag, size = 0x4, scoped, tag = 'scoped memory for tpu_custom_call.1']
    %7 = vsyncpa [#allocation3], 0
    // Predicated region
    $region2: #{tpu_custom_call.1} parent=1 // pred_check
      _
    $region3: #{tpu_custom_call.1} parent=1 // pred_check_branch
      %9 = sbr.rel (0) target = $region5
    $region4: #{tpu_custom_call.1} parent=1 // pred_region
      %s11 = ssub.s32 256, 256
      %12 = vsyncadd [#allocation3], %s11
      %s13 = sshll.u32 [#allocation2], 4
      %s14 = int_to_ptr.vmem [resolvable:$true] %s13
      %19 = dma.hbm_to_vmem [thread:$0]  %s0, 256, %s14, [#allocation3], 128, 128, 8
    $region5: #{tpu_custom_call.1} parent=1 // pred_fallthru
      _
    // Predicated region
    $region6: #{tpu_custom_call.1} parent=1 // pred_check
      _
    $region7: #{tpu_custom_call.1} parent=1 // pred_check_branch
      %21 = sbr.rel (0) target = $region9
    $region8: #{tpu_custom_call.1} parent=1 // pred_region
      _
    $region9: #{tpu_custom_call.1} parent=1 // pred_fallthru
      _
    // Predicated region
    $region10: #{tpu_custom_call.1} parent=1 // pred_check
      _
    $region11: #{tpu_custom_call.1} parent=1 // pred_check_branch
      %23 = sbr.rel (0) target = $region13
    $region12: #{tpu_custom_call.1} parent=1 // pred_region
      %24 = dma.done [#allocation3], 256
    $region13: #{tpu_custom_call.1} parent=1 // pred_fallthru
      _
    %v25 = vld [vmem:[#allocation2] sm:$0xff]
    %v26 = vld [vmem:[#allocation2 + $0x8] sm:$0xff]
    %v27 = vld [vmem:[%s1] sm:$0x1]
    %v29 = vlaneseq
    %v30 = vshrl.u32 %v29, 7
    %v31 = vsub.s32 0, %v30
    %v32 = vrot.slane %v27, %v31
    %v34 = vmul.f32 %v25, %v32
    %v35 = vmul.f32 %v26, %v32
    %vm36 = vcmask 261120
    %v37 = vsel %vm36, %v34, 0.0
    %38 = vadd.xlane.f32.xlu0 %v37
    %v39 = vpop.xlane.xlu0 %38
    %v40 = vsel %vm36, %v35, 0.0
    %41 = vadd.xlane.f32.xlu0 %v40
    %v42 = vpop.xlane.xlu0 %41
    %vm43 = vcmask 7168
    %44 = vst.msk [vmem:[%s2] sm:$0xff] %vm43, %v39
    %45 = vst.msk [vmem:[%s2 + $0x8] sm:$0xff] %vm43, %v42
    // Predicated region
    $region14: #{tpu_custom_call.1} parent=1 // pred_check
      _
    $region15: #{tpu_custom_call.1} parent=1 // pred_check_branch
      %47 = sbr.rel (0) target = $region17
    $region16: #{tpu_custom_call.1} parent=1 // pred_region
      _
    $region17: #{tpu_custom_call.1} parent=1 // pred_fallthru
      _
    // Predicated region
    $region18: #{tpu_custom_call.1} parent=1 // pred_check
      _
    $region19: #{tpu_custom_call.1} parent=1 // pred_check_branch
      %49 = sbr.rel (0) target = $region21
    $region20: #{tpu_custom_call.1} parent=1 // pred_region
      _
    $region21: #{tpu_custom_call.1} parent=1 // pred_fallthru
      _
    %50 = vsyncpa [#allocation3], 1

</llo_original>
